<compile_context>
chip_gen: v7x
topology: tpu7x:2x2x1
jax: 0.10.0
libtpu: 0.0.40
codegen_flags: <defaults>
</compile_context>

<pallas_src>
import numpy as np
import jax
import jax.numpy as jnp
from jax import lax
from jax.experimental import pallas as pl
from jax.experimental.pallas import tpu as pltpu

N_PACK = 8                          # 8 x 4-bit nibbles per int32
AWQ_ORDER = [0, 2, 4, 6, 1, 3, 5, 7]
MXU_DEPTH = 256                     # target contraction depth per MXU chunk


def _round_up(a, b):
    return (a + b - 1) // b * b


# ----------------------------------------------------------------------------- #
# Pallas kernel: fused 4-bit group-dequant GEMM
# ----------------------------------------------------------------------------- #
def awq_gemm_kernel(x_ref, qw_ref, sc_ref, zr_ref, b_ref, out_ref):
    """Computes one (tm, tn) output tile, reducing over the K-block grid axis.

    x_ref  : [tm, KB]      bf16  activations (KB = groups_per_block * group_size)
    qw_ref : [KB//8, tn]   int32 K-packed 4-bit weights (8 consecutive rows / word)
    sc_ref : [GPB, tn]     f32   per-group scales
    zr_ref : [GPB, tn]     f32   per-group zero points
    b_ref  : [1, tn]       f32   bias
    out_ref: [tm, tn]      f32   VMEM-resident accumulator / output
    """
    g = pl.program_id(2)

    @pl.when(g == 0)
    def _init():
        out_ref[...] = jnp.zeros_like(out_ref)

    kb8, tn = qw_ref.shape
    gpb = sc_ref.shape[0]
    kb = kb8 * N_PACK
    group = kb // gpb

    # Quant groups dequantized per MXU chunk so each jnp.dot has ~256-deep contraction.
    gpc = max(1, min(gpb, MXU_DEPTH // group))
    while gpb % gpc:
        gpc -= 1
    ck = gpc * group                  # contraction depth per chunk
    ckp = ck // N_PACK                # packed rows per chunk

    x_bf = x_ref[...]                                              # [tm, KB] bf16
    shifts = lax.broadcasted_iota(jnp.int32, (1, N_PACK, 1), 1) * 4

    acc = out_ref[...]
    for c in range(gpb // gpc):       # static unroll over chunks in this K block
        # Unpack all 8 nibbles of this chunk: [ckp, tn] -> [ckp, 8, tn] -> [ck, tn].
        # Row-major flat order is preserved (K-packed layout), so the merge reshape
        # is a (near) no-op relayout.
        qw = qw_ref[c * ckp:(c + 1) * ckp, :]                      # [ckp, tn] int32
        w2 = ((qw[:, None, :] >> shifts) & 0xF).reshape(ck, tn)    # [ck, tn] int32
        w2 = w2.astype(jnp.float32)

        # Per-group scale / zero broadcast to per-row (sublane broadcast + merge).
        s = sc_ref[c * gpc:(c + 1) * gpc, :]                       # [gpc, tn]
        z = zr_ref[c * gpc:(c + 1) * gpc, :]
        s_rows = jnp.broadcast_to(s[:, None, :], (gpc, group, tn)).reshape(ck, tn)
        z_rows = jnp.broadcast_to(z[:, None, :], (gpc, group, tn)).reshape(ck, tn)

        # Dequant in f32 ((w - z) exact), cast once to bf16 for the MXU.
        w_bf = ((w2 - z_rows) * s_rows).astype(jnp.bfloat16)       # [ck, tn]

        # One full-depth MXU matmul per chunk, f32 accumulation.
        acc = acc + jnp.dot(x_bf[:, c * ck:(c + 1) * ck], w_bf,
                            preferred_element_type=jnp.float32)
    out_ref[...] = acc                                             # one full-width store

    @pl.when(g == pl.num_programs(2) - 1)
    def _epilogue():
        out_ref[...] = out_ref[...] + b_ref[...]                   # fused bias add


def awq_gemm(x, qweight_k, scales, zeros, bias, group_size,
             tm_max=256, tn_max=512):
    """x: [M, K] f32 -> [M, N] f32 = x @ dequant(W) + bias (kernel-layout weights)."""
    M, K = x.shape
    N = qweight_k.shape[1]
    assert K % group_size == 0 and N % 128 == 0 and group_size % 8 == 0
    kg = K // group_size

    # Quant groups processed per grid step (deep contraction, amortized step overhead).
    gpb = kg if kg <= 8 else 8
    assert kg % gpb == 0, "number of quant groups must be <= 8 or a multiple of 8"
    kb = gpb * group_size

    # Lane-dense N tile (multiple of 128).
    tn = N
    for cand in (2048, 1024, 512, 256, 128):
        if cand <= tn_max and N % cand == 0:
            tn = cand
            break

    tm = min(tm_max, _round_up(M, 8))
    Mp = _round_up(M, tm)
    if Mp != M:
        x = jnp.pad(x, ((0, Mp - M), (0, 0)))
    x = x.astype(jnp.bfloat16)        # halve HBM/VMEM traffic for activations

    grid = (Mp // tm, N // tn, kg // gpb)

    cost = pl.CostEstimate(
        flops=2 * Mp * K * N,
        transcendentals=0,
        bytes_accessed=Mp * K * 2 + (K // 8) * N * 4 + 2 * kg * N * 4
                       + N * 4 + Mp * N * 4)

    out = pl.pallas_call(
        awq_gemm_kernel,
        out_shape=jax.ShapeDtypeStruct((Mp, N), jnp.float32),
        grid_spec=pltpu.PrefetchScalarGridSpec(
            num_scalar_prefetch=0,
            grid=grid,
            in_specs=[
                pl.BlockSpec((tm, kb), lambda i, j, g: (i, g)),            # x (bf16)
                pl.BlockSpec((kb // N_PACK, tn), lambda i, j, g: (g, j)),  # qweight (K-packed)
                pl.BlockSpec((gpb, tn), lambda i, j, g: (g, j)),           # scales
                pl.BlockSpec((gpb, tn), lambda i, j, g: (g, j)),           # zero points
                pl.BlockSpec((1, tn), lambda i, j, g: (0, j)),             # bias
            ],
            out_specs=pl.BlockSpec((tm, tn), lambda i, j, g: (i, j)),
        ),
        compiler_params=pltpu.CompilerParams(
            dimension_semantics=("parallel", "parallel", "arbitrary"),
            vmem_limit_bytes=32 * 1024 * 1024),
        cost_estimate=cost,
    )(x, qweight_k, scales, zeros, bias)

    return out[:M] if Mp != M else out


# ----------------------------------------------------------------------------- #
# Host-side packing / one-time checkpoint repack (plain numpy glue)
# ----------------------------------------------------------------------------- #
def _pack_awq_gemm(a_int):
    """[R, N] ints in 0..15 -> standard AWQ-GEMM packed [R, N//8] int32."""
    r_, n = a_int.shape
    packed = np.zeros((r_, n // N_PACK), dtype=np.uint32)
    for slot, col_off in enumerate(AWQ_ORDER):
        packed |= (a_int[:, col_off::N_PACK].astype(np.uint32) & 0xF) << np.uint32(4 * slot)
    return packed.view(np.int32)


def _unpack_awq_gemm(packed):
    """Standard AWQ-GEMM packed [R, N//8] int32 -> [R, N] ints in 0..15."""
    u = np.asarray(packed).view(np.uint32)
    r_, n8 = u.shape
    out = np.zeros((r_, n8 * N_PACK), dtype=np.int32)
    for slot, col_off in enumerate(AWQ_ORDER):
        out[:, col_off::N_PACK] = ((u >> np.uint32(4 * slot)) & np.uint32(0xF)).astype(np.int32)
    return out


def _pack_rows(w_int):
    """[K, N] ints in 0..15 -> [K//8, N] int32; nibble r of word k8 holds row 8*k8 + r."""
    k, n = w_int.shape
    packed = np.zeros((k // N_PACK, n), dtype=np.uint32)
    for r in range(N_PACK):
        packed |= (w_int[r::N_PACK, :].astype(np.uint32) & 0xF) << np.uint32(4 * r)
    return packed.view(np.int32)


def repack_awq_for_tpu(qweight, qzeros, scales):
    """One-time host-side repack of an AWQ-GEMM checkpoint into the kernel layout."""
    w_int = _unpack_awq_gemm(qweight)                 # [K, N]
    zeros = _unpack_awq_gemm(qzeros)                  # [kg, N]
    sc = np.asarray(scales, dtype=np.float32)
    return _pack_rows(w_int), sc, zeros.astype(np.float32)


def make_awq_linear(key, in_features, out_features, group_size):
    k_w, k_b = jax.random.split(key)
    w = np.asarray(jax.random.normal(k_w, (in_features, out_features), jnp.float32)) * 0.05
    bias = np.asarray(jax.random.normal(k_b, (out_features,), jnp.float32)) * 0.01

    kg = in_features // group_size
    wg = w.reshape(kg, group_size, out_features)
    wmax, wmin = wg.max(axis=1), wg.min(axis=1)
    scales = np.maximum(wmax - wmin, 1e-5) / 15.0               # [kg, out]
    zeros = np.clip(np.round(-wmin / scales), 0, 15)            # [kg, out]
    w_int = np.clip(np.round(wg / scales[:, None, :]) + zeros[:, None, :], 0, 15)
    w_int = w_int.reshape(in_features, out_features).astype(np.int32)
    zeros = zeros.astype(np.int32)

    # Standard AWQ-GEMM checkpoint tensors ...
    qweight_awq = _pack_awq_gemm(w_int)
    qzeros_awq = _pack_awq_gemm(zeros)
    # ... repacked once on the host into the TPU-kernel layout.
    qweight_k, scales_f, zeros_f = repack_awq_for_tpu(qweight_awq, qzeros_awq, scales)

    w_dq_ref = ((w_int.reshape(kg, group_size, -1) - zeros[:, None, :]).astype(np.float32)
                * scales[:, None, :]).reshape(in_features, out_features)

    return dict(
        qweight_k=jnp.asarray(qweight_k),
        scales=jnp.asarray(scales_f),
        zeros=jnp.asarray(zeros_f),
        bias=jnp.asarray(bias.reshape(1, out_features)),
        group_size=group_size,
        w_dq_ref=jnp.asarray(w_dq_ref),               # only for the correctness check
    )


def awq_linear(x, p):
    return awq_gemm(x, p["qweight_k"], p["scales"], p["zeros"], p["bias"],
                    p["group_size"])


# ----------------------------------------------------------------------------- #
# Tiny synthetic quantized causal LM + the BaseAWQForCausalLM-style wrapper
# ----------------------------------------------------------------------------- #
class TinyQuantCausalLM:
    def __init__(self, key, vocab, hidden, group_size):
        k_e, k_fc, k_lm = jax.random.split(key, 3)
        self.vocab, self.hidden = vocab, hidden
        self.embed = jax.random.normal(k_e, (vocab, hidden), jnp.float32) * 0.5
        self.fc = make_awq_linear(k_fc, hidden, hidden, group_size)
        self.lm_head = make_awq_linear(k_lm, hidden, vocab, group_size)

    def __call__(self, input_ids):
        b, s = input_ids.shape
        h = jnp.take(self.embed, input_ids, axis=0).reshape(b * s, self.hidden)
        h = jax.nn.gelu(awq_linear(h, self.fc))
        logits = awq_linear(h, self.lm_head)
        return logits.reshape(b, s, self.vocab)

    def reference(self, input_ids):
        b, s = input_ids.shape
        h = jnp.take(self.embed, input_ids, axis=0).reshape(b * s, self.hidden)
        h = jax.nn.gelu(h @ self.fc["w_dq_ref"] + self.fc["bias"])
        logits = h @ self.lm_head["w_dq_ref"] + self.lm_head["bias"]
        return logits.reshape(b, s, self.vocab)


class BaseAWQForCausalLM:
    """JAX mirror of the PyTorch wrapper: forward() delegates to the wrapped model."""

    def __init__(self, model, model_type, is_quantized, quant_config):
        self.model = model
        self.model_type = model_type
        self.is_quantized = is_quantized
        self.search_result = None
        self.quant_config = quant_config

    def forward(self, *args, **kwargs):
        return self.model(*args, **kwargs)

    # TODO(synk): generate() (autoregressive decode loop), quantize() (AWQ calibration
    # search over 'pileval'), save_quantized()/from_pretrained()/from_quantized()
    # (checkpoint + HF hub I/O) are host-side / framework glue with no Pallas equivalent.


# ----------------------------------------------------------------------------- #
if __name__ == "__main__":
    B, S, HIDDEN, VOCAB, GROUP = 2, 8, 256, 256, 128

    key = jax.random.PRNGKey(0)
    k_model, k_ids = jax.random.split(key)

    model = TinyQuantCausalLM(k_model, VOCAB, HIDDEN, GROUP)
    awq_model = BaseAWQForCausalLM(
        model, model_type="tiny",
        is_quantized=True,
        quant_config={"zero_point": True, "q_group_size": GROUP,
                      "w_bit": 4, "version": "GEMM"})

    input_ids = jax.random.randint(k_ids, (B, S), 0, VOCAB, dtype=jnp.int32)

    logits = awq_model.forward(input_ids)
    logits = jax.block_until_ready(logits)

    ref = jax.block_until_ready(model.reference(input_ids))
    assert logits.shape == (B, S, VOCAB)
    assert np.allclose(np.asarray(logits), np.asarray(ref), rtol=3e-2, atol=3e-2), \
        "Pallas AWQ GEMM mismatch vs dequantized reference"

    print("KERNEL_OK")
</pallas_src>

<mosaic_0001>
module attributes {stable_mosaic.version = 11 : i64} {
  func.func @awq_gemm_kernel(%arg0: i32, %arg1: i32, %arg2: i32, %arg3: memref<16x256xbf16, #tpu.memory_space<vmem>>, %arg4: memref<32x256xi32, #tpu.memory_space<vmem>>, %arg5: memref<2x256xf32, #tpu.memory_space<vmem>>, %arg6: memref<2x256xf32, #tpu.memory_space<vmem>>, %arg7: memref<1x256xf32, #tpu.memory_space<vmem>>, %arg8: memref<16x256xf32, #tpu.memory_space<vmem>>) attributes {dimension_semantics = [#tpu.dimension_semantics<parallel>, #tpu.dimension_semantics<parallel>, #tpu.dimension_semantics<arbitrary>], iteration_bounds = array<i64: 1, 1, 1>, scalar_prefetch = 0 : i64, scratch_operands = 0 : i64, tpu.core_type = #tpu.core_type<tc>, window_params = [{transform_indices = @transform_0, window_bounds = array<i64: 16, 256>}, {transform_indices = @transform_1, window_bounds = array<i64: 32, 256>}, {transform_indices = @transform_2, window_bounds = array<i64: 2, 256>}, {transform_indices = @transform_3, window_bounds = array<i64: 2, 256>}, {transform_indices = @transform_4, window_bounds = array<i64: 1, 256>}, {transform_indices = @transform_5, window_bounds = array<i64: 16, 256>}]} {
    %c0_i32 = arith.constant 0 : i32
    %0 = arith.cmpi eq, %arg2, %c0_i32 : i32
    %1 = arith.extui %0 : i1 to i32
    %c0_i32_0 = arith.constant 0 : i32
    %2 = arith.cmpi ne, %1, %c0_i32_0 : i32
    scf.if %2 {
      %cst_14 = arith.constant 0.000000e+00 : f32
      %36 = vector.broadcast %cst_14 : f32 to vector<16x256xf32>
      %c0_15 = arith.constant 0 : index
      %c0_16 = arith.constant 0 : index
      %37 = vector.load %arg8[%c0_15, %c0_16] : memref<16x256xf32, #tpu.memory_space<vmem>>, vector<16x256xf32>
      tpu.vector_store %arg8[%c0_15, %c0_16], %36 {strides = array<i32>} : memref<16x256xf32, #tpu.memory_space<vmem>>, vector<16x256xf32>,
    } else {
    }
    %c0 = arith.constant 0 : index
    %c0_1 = arith.constant 0 : index
    %3 = vector.load %arg3[%c0, %c0_1] : memref<16x256xbf16, #tpu.memory_space<vmem>>, vector<16x256xbf16>
    %4 = tpu.iota {dimensions = array<i32: 1>} : vector<1x8x1xi32>
    %c4_i32 = arith.constant 4 : i32
    %5 = vector.broadcast %c4_i32 : i32 to vector<1x8x1xi32>
    %6 = arith.muli %4, %5 : vector<1x8x1xi32>
    %c0_2 = arith.constant 0 : index
    %c0_3 = arith.constant 0 : index
    %7 = vector.load %arg8[%c0_2, %c0_3] : memref<16x256xf32, #tpu.memory_space<vmem>>, vector<16x256xf32>
    %c0_4 = arith.constant 0 : index
    %c0_5 = arith.constant 0 : index
    %8 = vector.load %arg4[%c0_4, %c0_5] : memref<32x256xi32, #tpu.memory_space<vmem>>, vector<32x256xi32>
    %9 = vector.shape_cast %8 : vector<32x256xi32> to vector<32x1x256xi32>
    %10 = vector.broadcast %9 : vector<32x1x256xi32> to vector<32x8x256xi32>
    %11 = vector.broadcast %6 : vector<1x8x1xi32> to vector<32x8x256xi32>
    %12 = arith.shrsi %10, %11 : vector<32x8x256xi32>
    %c15_i32 = arith.constant 15 : i32
    %13 = vector.broadcast %c15_i32 : i32 to vector<32x8x256xi32>
    %14 = arith.andi %12, %13 : vector<32x8x256xi32>
    %15 = vector.shape_cast %14 : vector<32x8x256xi32> to vector<256x256xi32>
    %16 = arith.sitofp %15 : vector<256x256xi32> to vector<256x256xf32>
    %c0_6 = arith.constant 0 : index
    %c0_7 = arith.constant 0 : index
    %17 = vector.load %arg5[%c0_6, %c0_7] : memref<2x256xf32, #tpu.memory_space<vmem>>, vector<2x256xf32>
    %c0_8 = arith.constant 0 : index
    %c0_9 = arith.constant 0 : index
    %18 = vector.load %arg6[%c0_8, %c0_9] : memref<2x256xf32, #tpu.memory_space<vmem>>, vector<2x256xf32>
    %19 = vector.shape_cast %17 : vector<2x256xf32> to vector<2x1x256xf32>
    %20 = vector.shape_cast %19 : vector<2x1x256xf32> to vector<2x1x256xf32>
    %21 = vector.broadcast %20 : vector<2x1x256xf32> to vector<2x128x256xf32>
    %22 = vector.shape_cast %21 : vector<2x128x256xf32> to vector<256x256xf32>
    %23 = vector.shape_cast %18 : vector<2x256xf32> to vector<2x1x256xf32>
    %24 = vector.shape_cast %23 : vector<2x1x256xf32> to vector<2x1x256xf32>
    %25 = vector.broadcast %24 : vector<2x1x256xf32> to vector<2x128x256xf32>
    %26 = vector.shape_cast %25 : vector<2x128x256xf32> to vector<256x256xf32>
    %27 = arith.subf %16, %26 : vector<256x256xf32>
    %28 = arith.mulf %27, %22 : vector<256x256xf32>
    %29 = arith.truncf %28 : vector<256x256xf32> to vector<256x256xbf16>
    %cst = arith.constant dense<0.000000e+00> : vector<16x256xf32>
    %30 = tpu.matmul %3, %29, %cst {dimension_numbers = #tpu.dot_dimension_numbers<[1], [0], [0], [1], [0, 0, 1, 1], [], []>} : vector<16x256xbf16>, vector<256x256xbf16>, vector<16x256xf32> -> vector<16x256xf32>
    %31 = arith.addf %7, %30 : vector<16x256xf32>
    %c0_10 = arith.constant 0 : index
    %c0_11 = arith.constant 0 : index
    %32 = vector.load %arg8[%c0_10, %c0_11] : memref<16x256xf32, #tpu.memory_space<vmem>>, vector<16x256xf32>
    tpu.vector_store %arg8[%c0_10, %c0_11], %31 {strides = array<i32>} : memref<16x256xf32, #tpu.memory_space<vmem>>, vector<16x256xf32>,
    %c0_i32_12 = arith.constant 0 : i32
    %33 = arith.cmpi eq, %arg2, %c0_i32_12 : i32
    %34 = arith.extui %33 : i1 to i32
    %c0_i32_13 = arith.constant 0 : i32
    %35 = arith.cmpi ne, %34, %c0_i32_13 : i32
    scf.if %35 {
      %c0_14 = arith.constant 0 : index
      %c0_15 = arith.constant 0 : index
      %36 = vector.load %arg8[%c0_14, %c0_15] : memref<16x256xf32, #tpu.memory_space<vmem>>, vector<16x256xf32>
      %c0_16 = arith.constant 0 : index
      %c0_17 = arith.constant 0 : index
      %37 = vector.load %arg7[%c0_16, %c0_17] : memref<1x256xf32, #tpu.memory_space<vmem>>, vector<1x256xf32>
      %38 = vector.broadcast %37 : vector<1x256xf32> to vector<16x256xf32>
      %39 = arith.addf %36, %38 : vector<16x256xf32>
      %c0_18 = arith.constant 0 : index
      %c0_19 = arith.constant 0 : index
      %40 = vector.load %arg8[%c0_18, %c0_19] : memref<16x256xf32, #tpu.memory_space<vmem>>, vector<16x256xf32>
      tpu.vector_store %arg8[%c0_18, %c0_19], %39 {strides = array<i32>} : memref<16x256xf32, #tpu.memory_space<vmem>>, vector<16x256xf32>,
    } else {
    }
    return
  }
  func.func @transform_0(%arg0: i32, %arg1: i32, %arg2: i32) -> (i32, i32) {
    %c0_i32 = arith.constant 0 : i32
    return %arg0, %arg2 : i32, i32
  }
  func.func @transform_1(%arg0: i32, %arg1: i32, %arg2: i32) -> (i32, i32) {
    %c0_i32 = arith.constant 0 : i32
    return %arg2, %arg1 : i32, i32
  }
  func.func @transform_2(%arg0: i32, %arg1: i32, %arg2: i32) -> (i32, i32) {
    %c0_i32 = arith.constant 0 : i32
    return %arg2, %arg1 : i32, i32
  }
  func.func @transform_3(%arg0: i32, %arg1: i32, %arg2: i32) -> (i32, i32) {
    %c0_i32 = arith.constant 0 : i32
    return %arg2, %arg1 : i32, i32
  }
  func.func @transform_4(%arg0: i32, %arg1: i32, %arg2: i32) -> (i32, i32) {
    %c0_i32 = arith.constant 0 : i32
    %c0_i32_0 = arith.constant 0 : i32
    return %c0_i32, %arg1 : i32, i32
  }
  func.func @transform_5(%arg0: i32, %arg1: i32, %arg2: i32) -> (i32, i32) {
    %c0_i32 = arith.constant 0 : i32
    return %arg0, %arg1 : i32, i32
  }
}

</mosaic_0001>

<llo_original>
// kernel: tpu_custom_call.1
$region0: #{tpu_custom_call.1}
  #allocation0 [shape = 'u32[]', space=smem, size = 0x4, offset = 0x4, fixed_abs, tag = 'smem constant byte address 0x4 - core index']
  #allocation1 [shape = 'u32[144,128]{1,0:T(1,128)}', space=vmem, size = 0x12000, scoped, tag = 'internal scratch']
  %s0 = inlined_call_operand.hbm [shape: bf16[16,256], index: 0, kind: input, shape index: {}]
  %s1 = inlined_call_operand.hbm [shape: s32[32,256], index: 1, kind: input, shape index: {}]
  %s2 = inlined_call_operand.vmem [shape: f32[2,256], index: 2, kind: input, shape index: {}]
  %s3 = inlined_call_operand.vmem [shape: f32[2,256], index: 3, kind: input, shape index: {}]
  %s4 = inlined_call_operand.vmem [shape: f32[1,256], index: 4, kind: input, shape index: {}]
  %s5 = inlined_call_operand.hbm [shape: f32[16,256], index: 5, kind: output, shape index: {}]
  %s6 = sld [smem:[#allocation0]]
  $region46: #{tpu_custom_call.1} parent=0
    _
  %s8 = ssub.s32 1, %s6
  %s9 = scalar_select 0, %s8, %s6
  $region1: #{tpu_custom_call.1} parent=0
    #allocation2 [shape = 'u8[8192]{0}', space=vmem, size = 0x2000, scoped, tag = 'input window, operand 0, single buffered']
    #allocation3 [shape = 's32[1]{0}', space=sflag, size = 0x4, scoped, tag = 'scoped memory for tpu_custom_call.1']
    #allocation4 [shape = 's32[1]{0}', space=sflag, size = 0x4, scoped, tag = 'scoped memory for tpu_custom_call.1']
    #allocation5 [shape = 'u8[32768]{0}', space=vmem, size = 0x8000, scoped, tag = 'input window, operand 1, single buffered']
    #allocation6 [shape = 's32[1]{0}', space=sflag, size = 0x4, scoped, tag = 'scoped memory for tpu_custom_call.1']
    #allocation7 [shape = 'u8[16384]{0}', space=vmem, size = 0x4000, scoped, tag = 'output window, operand 0, single buffered']
    %10 = vsyncpa [#allocation3], 0
    %11 = vsyncpa [#allocation6], 0
    %12 = vsyncpa [#allocation4], 0
    // Predicated region
    $region2: #{tpu_custom_call.1} parent=1 // pred_check
      _
    $region3: #{tpu_custom_call.1} parent=1 // pred_check_branch
      %14 = sbr.rel (0) target = $region5
    $region4: #{tpu_custom_call.1} parent=1 // pred_region
      %s16 = ssub.s32 256, 256
      %17 = vsyncadd [#allocation3], %s16
      %s18 = sshll.u32 [#allocation2], 4
      %s19 = int_to_ptr.vmem [resolvable:$true] %s18
      %24 = dma.hbm_to_vmem [thread:$0]  %s0, 256, %s19, [#allocation3], 128, 128, 8
    $region5: #{tpu_custom_call.1} parent=1 // pred_fallthru
      _
    // Predicated region
    $region6: #{tpu_custom_call.1} parent=1 // pred_check
      _
    $region7: #{tpu_custom_call.1} parent=1 // pred_check_branch
      %26 = sbr.rel (0) target = $region9
    $region8: #{tpu_custom_call.1} parent=1 // pred_region
      %s28 = ssub.s32 1024, 1024
      %29 = vsyncadd [#allocation6], %s28
      %s30 = sshll.u32 [#allocation5], 4
      %s31 = int_to_ptr.vmem [resolvable:$true] %s30
      %36 = dma.hbm_to_vmem [thread:$0]  %s1, 1024, %s31, [#allocation6], 256, 256, 16
    $region9: #{tpu_custom_call.1} parent=1 // pred_fallthru
      _
    // Predicated region
    $region10: #{tpu_custom_call.1} parent=1 // pred_check
      _
    $region11: #{tpu_custom_call.1} parent=1 // pred_check_branch
      %38 = sbr.rel (0) target = $region13
    $region12: #{tpu_custom_call.1} parent=1 // pred_region
      _
    $region13: #{tpu_custom_call.1} parent=1 // pred_fallthru
      _
    // Predicated region
    $region14: #{tpu_custom_call.1} parent=1 // pred_check
      _
    $region15: #{tpu_custom_call.1} parent=1 // pred_check_branch
      %40 = sbr.rel (0) target = $region17
    $region16: #{tpu_custom_call.1} parent=1 // pred_region
      _
    $region17: #{tpu_custom_call.1} parent=1 // pred_fallthru
      _
    // Predicated region
    $region18: #{tpu_custom_call.1} parent=1 // pred_check
      _
    $region19: #{tpu_custom_call.1} parent=1 // pred_check_branch
      %42 = sbr.rel (0) target = $region21
    $region20: #{tpu_custom_call.1} parent=1 // pred_region
      _
    $region21: #{tpu_custom_call.1} parent=1 // pred_fallthru
      _
    // Predicated region
    $region22: #{tpu_custom_call.1} parent=1 // pred_check
      _
    $region23: #{tpu_custom_call.1} parent=1 // pred_check_branch
      %44 = sbr.rel (0) target = $region25
    $region24: #{tpu_custom_call.1} parent=1 // pred_region
      %45 = dma.done [#allocation3], 256
    $region25: #{tpu_custom_call.1} parent=1 // pred_fallthru
      _
    // Predicated region
    $region26: #{tpu_custom_call.1} parent=1 // pred_check
      _
    $region27: #{tpu_custom_call.1} parent=1 // pred_check_branch
      %47 = sbr.rel (0) target = $region29
    $region28: #{tpu_custom_call.1} parent=1 // pred_region
      %48 = dma.done [#allocation6], 1024
    $region29: #{tpu_custom_call.1} parent=1 // pred_fallthru
      _
    %p49 = scmp.eq.s32.totalorder 0, 0
    // Predicated region
    $region30: #{tpu_custom_call.1} parent=1 // pred_check
      %p50 = pneg %p49
    $region31: #{tpu_custom_call.1} parent=1 // pred_check_branch
      %52 = sbr.rel (%p50) target = $region33
    $region32: #{tpu_custom_call.1} parent=1 // pred_region
      %53 = vst [vmem:[#allocation7] sm:$0xff] 0.0
      %54 = vst [vmem:[#allocation7 + $0x8] sm:$0xff] 0.0
      %55 = vst [vmem:[#allocation7 + $0x10] sm:$0xff] 0.0
      %56 = vst [vmem:[#allocation7 + $0x18] sm:$0xff] 0.0
    $region33: #{tpu_custom_call.1} parent=1 // pred_fallthru
      _
    %v57 = vld [vmem:[#allocation2] sm:$0xff]
    %v58 = vld [vmem:[#allocation2 + $0x8] sm:$0xff]
    %v59 = vlaneseq
    %v60 = vshrl.u32 %v59, 7
    %v61 = vmul.u32 %v60, 4
    %v62 = vld [vmem:[#allocation7] sm:$0xff]
    %v63 = vld [vmem:[#allocation7 + $0x8] sm:$0xff]
    %v64 = vld [vmem:[#allocation7 + $0x10] sm:$0xff]
    %v65 = vld [vmem:[#allocation7 + $0x18] sm:$0xff]
    %v66 = vld [vmem:[#allocation5] sm:$0xff]
    %v67 = vld [vmem:[#allocation5 + $0x8] sm:$0xff]
    %v68 = vld [vmem:[#allocation5 + $0x10] sm:$0xff]
    %v69 = vld [vmem:[#allocation5 + $0x18] sm:$0xff]
    %v70 = vld [vmem:[#allocation5 + $0x20] sm:$0xff]
    %v71 = vld [vmem:[#allocation5 + $0x28] sm:$0xff]
    %v72 = vld [vmem:[#allocation5 + $0x30] sm:$0xff]
    %v73 = vld [vmem:[#allocation5 + $0x38] sm:$0xff]
    %v74 = vcombine.low %v66, %v67
    %v75 = vcombine.high %v66, %v67
    %v77 = vunpack.c.l.s4 1966171168
    %v78 = vunpack.c.0.s8 %v77
    %v79 = vlaneseq
    %v80 = vshrl.u32 %v79, 7
    %v81 = vsub.s32 %v78, %v80
    %v82 = vrot.slane %v74, %v81
    %v84 = vunpack.c.l.s4 1966171168
    %v85 = vunpack.c.0.s8 %v84
    %v86 = vlaneseq
    %v87 = vshrl.u32 %v86, 7
    %v88 = vsub.s32 %v85, %v87
    %v89 = vrot.slane %v75, %v88
    %v90 = vcombine.high %v82, %v82
    %v91 = vcombine.high %v89, %v89
    %v93 = vunpack.c.l.s4 1966171168
    %v94 = vunpack.c.0.s8 %v93
    %v95 = vlaneseq
    %v96 = vshrl.u32 %v95, 7
    %v97 = vsub.s32 %v94, %v96
    %v98 = vrot.slane %v82, %v97
    %v100 = vunpack.c.l.s4 1966171168
    %v101 = vunpack.c.0.s8 %v100
    %v102 = vlaneseq
    %v103 = vshrl.u32 %v102, 7
    %v104 = vsub.s32 %v101, %v103
    %v105 = vrot.slane %v89, %v104
    %v107 = vunpack.c.l.s4 1966171168
    %v108 = vunpack.c.0.s8 %v107
    %v109 = vlaneseq
    %v110 = vshrl.u32 %v109, 7
    %v111 = vsub.s32 %v108, %v110
    %v112 = vrot.slane %v90, %v111
    %v114 = vunpack.c.l.s4 1966171168
    %v115 = vunpack.c.0.s8 %v114
    %v116 = vlaneseq
    %v117 = vshrl.u32 %v116, 7
    %v118 = vsub.s32 %v115, %v117
    %v119 = vrot.slane %v91, %v118
    %v120 = vcombine.high %v98, %v98
    %v121 = vcombine.high %v105, %v105
    %v122 = vcombine.high %v112, %v112
    %v123 = vcombine.high %v119, %v119
    %v124 = vcombine.low %v68, %v69
    %v125 = vcombine.high %v68, %v69
    %v127 = vunpack.c.l.s4 1966171168
    %v128 = vunpack.c.0.s8 %v127
    %v129 = vlaneseq
    %v130 = vshrl.u32 %v129, 7
    %v131 = vsub.s32 %v128, %v130
    %v132 = vrot.slane %v124, %v131
    %v134 = vunpack.c.l.s4 1966171168
    %v135 = vunpack.c.0.s8 %v134
    %v136 = vlaneseq
    %v137 = vshrl.u32 %v136, 7
    %v138 = vsub.s32 %v135, %v137
    %v139 = vrot.slane %v125, %v138
    %v140 = vcombine.high %v132, %v132
    %v141 = vcombine.high %v139, %v139
    %v143 = vunpack.c.l.s4 1966171168
    %v144 = vunpack.c.0.s8 %v143
    %v145 = vlaneseq
    %v146 = vshrl.u32 %v145, 7
    %v147 = vsub.s32 %v144, %v146
    %v148 = vrot.slane %v132, %v147
    %v150 = vunpack.c.l.s4 1966171168
    %v151 = vunpack.c.0.s8 %v150
    %v152 = vlaneseq
    %v153 = vshrl.u32 %v152, 7
    %v154 = vsub.s32 %v151, %v153
    %v155 = vrot.slane %v139, %v154
    %v157 = vunpack.c.l.s4 1966171168
    %v158 = vunpack.c.0.s8 %v157
    %v159 = vlaneseq
    %v160 = vshrl.u32 %v159, 7
    %v161 = vsub.s32 %v158, %v160
    %v162 = vrot.slane %v140, %v161
    %v164 = vunpack.c.l.s4 1966171168
    %v165 = vunpack.c.0.s8 %v164
    %v166 = vlaneseq
    %v167 = vshrl.u32 %v166, 7
    %v168 = vsub.s32 %v165, %v167
    %v169 = vrot.slane %v141, %v168
    %v170 = vcombine.high %v148, %v148
    %v171 = vcombine.high %v155, %v155
    %v172 = vcombine.high %v162, %v162
    %v173 = vcombine.high %v169, %v169
    %v174 = vcombine.low %v70, %v71
    %v175 = vcombine.high %v70, %v71
    %v177 = vunpack.c.l.s4 1966171168
    %v178 = vunpack.c.0.s8 %v177
    %v179 = vlaneseq
    %v180 = vshrl.u32 %v179, 7
    %v181 = vsub.s32 %v178, %v180
    %v182 = vrot.slane %v174, %v181
    %v184 = vunpack.c.l.s4 1966171168
    %v185 = vunpack.c.0.s8 %v184
    %v186 = vlaneseq
    %v187 = vshrl.u32 %v186, 7
    %v188 = vsub.s32 %v185, %v187
    %v189 = vrot.slane %v175, %v188
    %v190 = vcombine.high %v182, %v182
    %v191 = vcombine.high %v189, %v189
    %v193 = vunpack.c.l.s4 1966171168
    %v194 = vunpack.c.0.s8 %v193
    %v195 = vlaneseq
    %v196 = vshrl.u32 %v195, 7
    %v197 = vsub.s32 %v194, %v196
    %v198 = vrot.slane %v182, %v197
    %v200 = vunpack.c.l.s4 1966171168
    %v201 = vunpack.c.0.s8 %v200
    %v202 = vlaneseq
    %v203 = vshrl.u32 %v202, 7
    %v204 = vsub.s32 %v201, %v203
    %v205 = vrot.slane %v189, %v204
    %v207 = vunpack.c.l.s4 1966171168
    %v208 = vunpack.c.0.s8 %v207
    %v209 = vlaneseq
    %v210 = vshrl.u32 %v209, 7
    %v211 = vsub.s32 %v208, %v210
    %v212 = vrot.slane %v190, %v211
    %v214 = vunpack.c.l.s4 1966171168
    %v215 = vunpack.c.0.s8 %v214
    %v216 = vlaneseq
    %v217 = vshrl.u32 %v216, 7
    %v218 = vsub.s32 %v215, %v217
    %v219 = vrot.slane %v191, %v218
    %v220 = vcombine.high %v198, %v198
    %v221 = vcombine.high %v205, %v205
    %v222 = vcombine.high %v212, %v212
    %v223 = vcombine.high %v219, %v219
    %v224 = vcombine.low %v72, %v73
    %v225 = vcombine.high %v72, %v73
    %v227 = vunpack.c.l.s4 1966171168
    %v228 = vunpack.c.0.s8 %v227
    %v229 = vlaneseq
    %v230 = vshrl.u32 %v229, 7
    %v231 = vsub.s32 %v228, %v230
    %v232 = vrot.slane %v224, %v231
    %v234 = vunpack.c.l.s4 1966171168
    %v235 = vunpack.c.0.s8 %v234
    %v236 = vlaneseq
    %v237 = vshrl.u32 %v236, 7
    %v238 = vsub.s32 %v235, %v237
    %v239 = vrot.slane %v225, %v238
    %v240 = vcombine.high %v232, %v232
    %v241 = vcombine.high %v239, %v239
    %v243 = vunpack.c.l.s4 1966171168
    %v244 = vunpack.c.0.s8 %v243
    %v245 = vlaneseq
    %v246 = vshrl.u32 %v245, 7
    %v247 = vsub.s32 %v244, %v246
    %v248 = vrot.slane %v232, %v247
    %v250 = vunpack.c.l.s4 1966171168
    %v251 = vunpack.c.0.s8 %v250
    %v252 = vlaneseq
    %v253 = vshrl.u32 %v252, 7
    %v254 = vsub.s32 %v251, %v253
    %v255 = vrot.slane %v239, %v254
    %v257 = vunpack.c.l.s4 1966171168
    %v258 = vunpack.c.0.s8 %v257
    %v259 = vlaneseq
    %v260 = vshrl.u32 %v259, 7
    %v261 = vsub.s32 %v258, %v260
    %v262 = vrot.slane %v240, %v261
    %v264 = vunpack.c.l.s4 1966171168
    %v265 = vunpack.c.0.s8 %v264
    %v266 = vlaneseq
    %v267 = vshrl.u32 %v266, 7
    %v268 = vsub.s32 %v265, %v267
    %v269 = vrot.slane %v241, %v268
    %v270 = vcombine.high %v248, %v248
    %v271 = vcombine.high %v255, %v255
    %v272 = vcombine.high %v262, %v262
    %v273 = vcombine.high %v269, %v269
    %v274 = vlaneseq
    %v275 = vshrl.u32 %v274, 7
    %v276 = vsub.s32 0, %v275
    %v277 = vrot.slane %v98, %v276
    %v278 = vlaneseq
    %v279 = vshrl.u32 %v278, 7
    %v280 = vsub.s32 1, %v279
    %v281 = vrot.slane %v98, %v280
    %v282 = vlaneseq
    %v283 = vshrl.u32 %v282, 7
    %v284 = vsub.s32 0, %v283
    %v285 = vrot.slane %v112, %v284
    %v286 = vlaneseq
    %v287 = vshrl.u32 %v286, 7
    %v288 = vsub.s32 1, %v287
    %v289 = vrot.slane %v112, %v288
    %v290 = vlaneseq
    %v291 = vshrl.u32 %v290, 7
    %v292 = vsub.s32 0, %v291
    %v293 = vrot.slane %v120, %v292
    %v294 = vlaneseq
    %v295 = vshrl.u32 %v294, 7
    %v296 = vsub.s32 1, %v295
    %v297 = vrot.slane %v120, %v296
    %v298 = vlaneseq
    %v299 = vshrl.u32 %v298, 7
    %v300 = vsub.s32 0, %v299
    %v301 = vrot.slane %v122, %v300
    %v302 = vlaneseq
    %v303 = vshrl.u32 %v302, 7
    %v304 = vsub.s32 1, %v303
    %v305 = vrot.slane %v122, %v304
    %v306 = vlaneseq
    %v307 = vshrl.u32 %v306, 7
    %v308 = vsub.s32 0, %v307
    %v309 = vrot.slane %v105, %v308
    %v310 = vlaneseq
    %v311 = vshrl.u32 %v310, 7
    %v312 = vsub.s32 1, %v311
    %v313 = vrot.slane %v105, %v312
    %v314 = vlaneseq
    %v315 = vshrl.u32 %v314, 7
    %v316 = vsub.s32 0, %v315
    %v317 = vrot.slane %v119, %v316
    %v318 = vlaneseq
    %v319 = vshrl.u32 %v318, 7
    %v320 = vsub.s32 1, %v319
    %v321 = vrot.slane %v119, %v320
    %v322 = vlaneseq
    %v323 = vshrl.u32 %v322, 7
    %v324 = vsub.s32 0, %v323
    %v325 = vrot.slane %v121, %v324
    %v326 = vlaneseq
    %v327 = vshrl.u32 %v326, 7
    %v328 = vsub.s32 1, %v327
    %v329 = vrot.slane %v121, %v328
    %v330 = vlaneseq
    %v331 = vshrl.u32 %v330, 7
    %v332 = vsub.s32 0, %v331
    %v333 = vrot.slane %v123, %v332
    %v334 = vlaneseq
    %v335 = vshrl.u32 %v334, 7
    %v336 = vsub.s32 1, %v335
    %v337 = vrot.slane %v123, %v336
    %v338 = vlaneseq
    %v339 = vshrl.u32 %v338, 7
    %v340 = vsub.s32 0, %v339
    %v341 = vrot.slane %v148, %v340
    %v342 = vlaneseq
    %v343 = vshrl.u32 %v342, 7
    %v344 = vsub.s32 1, %v343
    %v345 = vrot.slane %v148, %v344
    %v346 = vlaneseq
    %v347 = vshrl.u32 %v346, 7
    %v348 = vsub.s32 0, %v347
    %v349 = vrot.slane %v162, %v348
    %v350 = vlaneseq
    %v351 = vshrl.u32 %v350, 7
    %v352 = vsub.s32 1, %v351
    %v353 = vrot.slane %v162, %v352
    %v354 = vlaneseq
    %v355 = vshrl.u32 %v354, 7
    %v356 = vsub.s32 0, %v355
    %v357 = vrot.slane %v170, %v356
    %v358 = vlaneseq
    %v359 = vshrl.u32 %v358, 7
    %v360 = vsub.s32 1, %v359
    %v361 = vrot.slane %v170, %v360
    %v362 = vlaneseq
    %v363 = vshrl.u32 %v362, 7
    %v364 = vsub.s32 0, %v363
    %v365 = vrot.slane %v172, %v364
    %v366 = vlaneseq
    %v367 = vshrl.u32 %v366, 7
    %v368 = vsub.s32 1, %v367
    %v369 = vrot.slane %v172, %v368
    %v370 = vlaneseq
    %v371 = vshrl.u32 %v370, 7
    %v372 = vsub.s32 0, %v371
    %v373 = vrot.slane %v155, %v372
    %v374 = vlaneseq
    %v375 = vshrl.u32 %v374, 7
    %v376 = vsub.s32 1, %v375
    %v377 = vrot.slane %v155, %v376
    %v378 = vlaneseq
    %v379 = vshrl.u32 %v378, 7
    %v380 = vsub.s32 0, %v379
    %v381 = vrot.slane %v169, %v380
    %v382 = vlaneseq
    %v383 = vshrl.u32 %v382, 7
    %v384 = vsub.s32 1, %v383
    %v385 = vrot.slane %v169, %v384
    %v386 = vlaneseq
    %v387 = vshrl.u32 %v386, 7
    %v388 = vsub.s32 0, %v387
    %v389 = vrot.slane %v171, %v388
    %v390 = vlaneseq
    %v391 = vshrl.u32 %v390, 7
    %v392 = vsub.s32 1, %v391
    %v393 = vrot.slane %v171, %v392
    %v394 = vlaneseq
    %v395 = vshrl.u32 %v394, 7
    %v396 = vsub.s32 0, %v395
    %v397 = vrot.slane %v173, %v396
    %v398 = vlaneseq
    %v399 = vshrl.u32 %v398, 7
    %v400 = vsub.s32 1, %v399
    %v401 = vrot.slane %v173, %v400
    %v402 = vlaneseq
    %v403 = vshrl.u32 %v402, 7
    %v404 = vsub.s32 0, %v403
    %v405 = vrot.slane %v198, %v404
    %v406 = vlaneseq
    %v407 = vshrl.u32 %v406, 7
    %v408 = vsub.s32 1, %v407
    %v409 = vrot.slane %v198, %v408
    %v410 = vlaneseq
    %v411 = vshrl.u32 %v410, 7
    %v412 = vsub.s32 0, %v411
    %v413 = vrot.slane %v212, %v412
    %v414 = vlaneseq
    %v415 = vshrl.u32 %v414, 7
    %v416 = vsub.s32 1, %v415
    %v417 = vrot.slane %v212, %v416
    %v418 = vlaneseq
    %v419 = vshrl.u32 %v418, 7
    %v420 = vsub.s32 0, %v419
    %v421 = vrot.slane %v220, %v420
    %v422 = vlaneseq
    %v423 = vshrl.u32 %v422, 7
    %v424 = vsub.s32 1, %v423
    %v425 = vrot.slane %v220, %v424
    %v426 = vlaneseq
    %v427 = vshrl.u32 %v426, 7
    %v428 = vsub.s32 0, %v427
    %v429 = vrot.slane %v222, %v428
    %v430 = vlaneseq
    %v431 = vshrl.u32 %v430, 7
    %v432 = vsub.s32 1, %v431
    %v433 = vrot.slane %v222, %v432
    %v434 = vlaneseq
    %v435 = vshrl.u32 %v434, 7
    %v436 = vsub.s32 0, %v435
    %v437 = vrot.slane %v205, %v436
    %v438 = vlaneseq
    %v439 = vshrl.u32 %v438, 7
    %v440 = vsub.s32 1, %v439
    %v441 = vrot.slane %v205, %v440
    %v442 = vlaneseq
    %v443 = vshrl.u32 %v442, 7
    %v444 = vsub.s32 0, %v443
    %v445 = vrot.slane %v219, %v444
    %v446 = vlaneseq
    %v447 = vshrl.u32 %v446, 7
    %v448 = vsub.s32 1, %v447
    %v449 = vrot.slane %v219, %v448
    %v450 = vlaneseq
    %v451 = vshrl.u32 %v450, 7
    %v452 = vsub.s32 0, %v451
    %v453 = vrot.slane %v221, %v452
    %v454 = vlaneseq
    %v455 = vshrl.u32 %v454, 7
    %v456 = vsub.s32 1, %v455
    %v457 = vrot.slane %v221, %v456
    %v458 = vlaneseq
    %v459 = vshrl.u32 %v458, 7
    %v460 = vsub.s32 0, %v459
    %v461 = vrot.slane %v223, %v460
    %v462 = vlaneseq
    %v463 = vshrl.u32 %v462, 7
    %v464 = vsub.s32 1, %v463
    %v465 = vrot.slane %v223, %v464
    %v466 = vlaneseq
    %v467 = vshrl.u32 %v466, 7
    %v468 = vsub.s32 0, %v467
    %v469 = vrot.slane %v248, %v468
    %v470 = vlaneseq
    %v471 = vshrl.u32 %v470, 7
    %v472 = vsub.s32 1, %v471
    %v473 = vrot.slane %v248, %v472
    %v474 = vlaneseq
    %v475 = vshrl.u32 %v474, 7
    %v476 = vsub.s32 0, %v475
    %v477 = vrot.slane %v262, %v476
    %v478 = vlaneseq
    %v479 = vshrl.u32 %v478, 7
    %v480 = vsub.s32 1, %v479
    %v481 = vrot.slane %v262, %v480
    %v482 = vlaneseq
    %v483 = vshrl.u32 %v482, 7
    %v484 = vsub.s32 0, %v483
    %v485 = vrot.slane %v270, %v484
    %v486 = vlaneseq
    %v487 = vshrl.u32 %v486, 7
    %v488 = vsub.s32 1, %v487
    %v489 = vrot.slane %v270, %v488
    %v490 = vlaneseq
    %v491 = vshrl.u32 %v490, 7
    %v492 = vsub.s32 0, %v491
    %v493 = vrot.slane %v272, %v492
    %v494 = vlaneseq
    %v495 = vshrl.u32 %v494, 7
    %v496 = vsub.s32 1, %v495
    %v497 = vrot.slane %v272, %v496
    %v498 = vlaneseq
    %v499 = vshrl.u32 %v498, 7
    %v500 = vsub.s32 0, %v499
    %v501 = vrot.slane %v255, %v500
    %v502 = vlaneseq
    %v503 = vshrl.u32 %v502, 7
    %v504 = vsub.s32 1, %v503
    %v505 = vrot.slane %v255, %v504
    %v506 = vlaneseq
    %v507 = vshrl.u32 %v506, 7
    %v508 = vsub.s32 0, %v507
    %v509 = vrot.slane %v269, %v508
    %v510 = vlaneseq
    %v511 = vshrl.u32 %v510, 7
    %v512 = vsub.s32 1, %v511
    %v513 = vrot.slane %v269, %v512
    %v514 = vlaneseq
    %v515 = vshrl.u32 %v514, 7
    %v516 = vsub.s32 0, %v515
    %v517 = vrot.slane %v271, %v516
    %v518 = vlaneseq
    %v519 = vshrl.u32 %v518, 7
    %v520 = vsub.s32 1, %v519
    %v521 = vrot.slane %v271, %v520
    %v522 = vlaneseq
    %v523 = vshrl.u32 %v522, 7
    %v524 = vsub.s32 0, %v523
    %v525 = vrot.slane %v273, %v524
    %v526 = vlaneseq
    %v527 = vshrl.u32 %v526, 7
    %v528 = vsub.s32 1, %v527
    %v529 = vrot.slane %v273, %v528
    %v530 = vshra.s32 %v277, %v61
    %v531 = vshra.s32 %v281, %v61
    %v532 = vshra.s32 %v285, %v61
    %v533 = vshra.s32 %v289, %v61
    %v534 = vshra.s32 %v293, %v61
    %v535 = vshra.s32 %v297, %v61
    %v536 = vshra.s32 %v301, %v61
    %v537 = vshra.s32 %v305, %v61
    %v538 = vshra.s32 %v309, %v61
    %v539 = vshra.s32 %v313, %v61
    %v540 = vshra.s32 %v317, %v61
    %v541 = vshra.s32 %v321, %v61
    %v542 = vshra.s32 %v325, %v61
    %v543 = vshra.s32 %v329, %v61
    %v544 = vshra.s32 %v333, %v61
    %v545 = vshra.s32 %v337, %v61
    %v546 = vshra.s32 %v341, %v61
    %v547 = vshra.s32 %v345, %v61
    %v548 = vshra.s32 %v349, %v61
    %v549 = vshra.s32 %v353, %v61
    %v550 = vshra.s32 %v357, %v61
    %v551 = vshra.s32 %v361, %v61
    %v552 = vshra.s32 %v365, %v61
    %v553 = vshra.s32 %v369, %v61
    %v554 = vshra.s32 %v373, %v61
    %v555 = vshra.s32 %v377, %v61
    %v556 = vshra.s32 %v381, %v61
    %v557 = vshra.s32 %v385, %v61
    %v558 = vshra.s32 %v389, %v61
    %v559 = vshra.s32 %v393, %v61
    %v560 = vshra.s32 %v397, %v61
    %v561 = vshra.s32 %v401, %v61
    %v562 = vshra.s32 %v405, %v61
    %v563 = vshra.s32 %v409, %v61
    %v564 = vshra.s32 %v413, %v61
    %v565 = vshra.s32 %v417, %v61
    %v566 = vshra.s32 %v421, %v61
    %v567 = vshra.s32 %v425, %v61
    %v568 = vshra.s32 %v429, %v61
    %v569 = vshra.s32 %v433, %v61
    %v570 = vshra.s32 %v437, %v61
    %v571 = vshra.s32 %v441, %v61
    %v572 = vshra.s32 %v445, %v61
    %v573 = vshra.s32 %v449, %v61
    %v574 = vshra.s32 %v453, %v61
    %v575 = vshra.s32 %v457, %v61
    %v576 = vshra.s32 %v461, %v61
    %v577 = vshra.s32 %v465, %v61
    %v578 = vshra.s32 %v469, %v61
    %v579 = vshra.s32 %v473, %v61
    %v580 = vshra.s32 %v477, %v61
    %v581 = vshra.s32 %v481, %v61
    %v582 = vshra.s32 %v485, %v61
    %v583 = vshra.s32 %v489, %v61
    %v584 = vshra.s32 %v493, %v61
    %v585 = vshra.s32 %v497, %v61
    %v586 = vshra.s32 %v501, %v61
    %v587 = vshra.s32 %v505, %v61
    %v588 = vshra.s32 %v509, %v61
    %v589 = vshra.s32 %v513, %v61
    %v590 = vshra.s32 %v517, %v61
    %v591 = vshra.s32 %v521, %v61
    %v592 = vshra.s32 %v525, %v61
    %v593 = vshra.s32 %v529, %v61
    %v594 = vand.u32 %v530, 15
    %v595 = vand.u32 %v531, 15
    %v596 = vand.u32 %v532, 15
    %v597 = vand.u32 %v533, 15
    %v598 = vand.u32 %v534, 15
    %v599 = vand.u32 %v535, 15
    %v600 = vand.u32 %v536, 15
    %v601 = vand.u32 %v537, 15
    %v602 = vand.u32 %v538, 15
    %v603 = vand.u32 %v539, 15
    %v604 = vand.u32 %v540, 15
    %v605 = vand.u32 %v541, 15
    %v606 = vand.u32 %v542, 15
    %v607 = vand.u32 %v543, 15
    %v608 = vand.u32 %v544, 15
    %v609 = vand.u32 %v545, 15
    %v610 = vand.u32 %v546, 15
    %v611 = vand.u32 %v547, 15
    %v612 = vand.u32 %v548, 15
    %v613 = vand.u32 %v549, 15
    %v614 = vand.u32 %v550, 15
    %v615 = vand.u32 %v551, 15
    %v616 = vand.u32 %v552, 15
    %v617 = vand.u32 %v553, 15
    %v618 = vand.u32 %v554, 15
    %v619 = vand.u32 %v555, 15
    %v620 = vand.u32 %v556, 15
    %v621 = vand.u32 %v557, 15
    %v622 = vand.u32 %v558, 15
    %v623 = vand.u32 %v559, 15
    %v624 = vand.u32 %v560, 15
    %v625 = vand.u32 %v561, 15
    %v626 = vand.u32 %v562, 15
    %v627 = vand.u32 %v563, 15
    %v628 = vand.u32 %v564, 15
    %v629 = vand.u32 %v565, 15
    %v630 = vand.u32 %v566, 15
    %v631 = vand.u32 %v567, 15
    %v632 = vand.u32 %v568, 15
    %v633 = vand.u32 %v569, 15
    %v634 = vand.u32 %v570, 15
    %v635 = vand.u32 %v571, 15
    %v636 = vand.u32 %v572, 15
    %v637 = vand.u32 %v573, 15
    %v638 = vand.u32 %v574, 15
    %v639 = vand.u32 %v575, 15
    %v640 = vand.u32 %v576, 15
    %v641 = vand.u32 %v577, 15
    %v642 = vand.u32 %v578, 15
    %v643 = vand.u32 %v579, 15
    %v644 = vand.u32 %v580, 15
    %v645 = vand.u32 %v581, 15
    %v646 = vand.u32 %v582, 15
    %v647 = vand.u32 %v583, 15
    %v648 = vand.u32 %v584, 15
    %v649 = vand.u32 %v585, 15
    %v650 = vand.u32 %v586, 15
    %v651 = vand.u32 %v587, 15
    %v652 = vand.u32 %v588, 15
    %v653 = vand.u32 %v589, 15
    %v654 = vand.u32 %v590, 15
    %v655 = vand.u32 %v591, 15
    %v656 = vand.u32 %v592, 15
    %v657 = vand.u32 %v593, 15
    %v658 = vcvt.s32.f32 %v594
    %v659 = vcvt.s32.f32 %v595
    %v660 = vcvt.s32.f32 %v596
    %v661 = vcvt.s32.f32 %v597
    %v662 = vcvt.s32.f32 %v598
    %v663 = vcvt.s32.f32 %v599
    %v664 = vcvt.s32.f32 %v600
    %v665 = vcvt.s32.f32 %v601
    %v666 = vcvt.s32.f32 %v602
    %v667 = vcvt.s32.f32 %v603
    %v668 = vcvt.s32.f32 %v604
    %v669 = vcvt.s32.f32 %v605
    %v670 = vcvt.s32.f32 %v606
    %v671 = vcvt.s32.f32 %v607
    %v672 = vcvt.s32.f32 %v608
    %v673 = vcvt.s32.f32 %v609
    %v674 = vcvt.s32.f32 %v610
    %v675 = vcvt.s32.f32 %v611
    %v676 = vcvt.s32.f32 %v612
    %v677 = vcvt.s32.f32 %v613
    %v678 = vcvt.s32.f32 %v614
    %v679 = vcvt.s32.f32 %v615
    %v680 = vcvt.s32.f32 %v616
    %v681 = vcvt.s32.f32 %v617
    %v682 = vcvt.s32.f32 %v618
    %v683 = vcvt.s32.f32 %v619
    %v684 = vcvt.s32.f32 %v620
    %v685 = vcvt.s32.f32 %v621
    %v686 = vcvt.s32.f32 %v622
    %v687 = vcvt.s32.f32 %v623
    %v688 = vcvt.s32.f32 %v624
    %v689 = vcvt.s32.f32 %v625
    %v690 = vcvt.s32.f32 %v626
    %v691 = vcvt.s32.f32 %v627
    %v692 = vcvt.s32.f32 %v628
    %v693 = vcvt.s32.f32 %v629
    %v694 = vcvt.s32.f32 %v630
    %v695 = vcvt.s32.f32 %v631
    %v696 = vcvt.s32.f32 %v632
    %v697 = vcvt.s32.f32 %v633
    %v698 = vcvt.s32.f32 %v634
    %v699 = vcvt.s32.f32 %v635
    %v700 = vcvt.s32.f32 %v636
    %v701 = vcvt.s32.f32 %v637
    %v702 = vcvt.s32.f32 %v638
    %v703 = vcvt.s32.f32 %v639
    %v704 = vcvt.s32.f32 %v640
    %v705 = vcvt.s32.f32 %v641
    %v706 = vcvt.s32.f32 %v642
    %v707 = vcvt.s32.f32 %v643
    %v708 = vcvt.s32.f32 %v644
    %v709 = vcvt.s32.f32 %v645
    %v710 = vcvt.s32.f32 %v646
    %v711 = vcvt.s32.f32 %v647
    %v712 = vcvt.s32.f32 %v648
    %v713 = vcvt.s32.f32 %v649
    %v714 = vcvt.s32.f32 %v650
    %v715 = vcvt.s32.f32 %v651
    %v716 = vcvt.s32.f32 %v652
    %v717 = vcvt.s32.f32 %v653
    %v718 = vcvt.s32.f32 %v654
    %v719 = vcvt.s32.f32 %v655
    %v720 = vcvt.s32.f32 %v656
    %v721 = vcvt.s32.f32 %v657
    %v722 = vld [vmem:[%s2] sm:$0xf]
    %v723 = vld [vmem:[%s3] sm:$0xf]
    %v726 = vunpack.c.l.s4 1966171168
    %v727 = vunpack.c.0.s8 %v726
    %v728 = vlaneseq
    %v729 = vshrl.u32 %v728, 7
    %v730 = vsub.s32 %v727, %v729
    %v731 = vrot.slane %v722, %v730
    %v732 = vcombine.high %v731, %v731
    %v733 = vlaneseq
    %v734 = vshrl.u32 %v733, 7
    %v735 = vsub.s32 0, %v734
    %v736 = vrot.slane %v731, %v735
    %v737 = vlaneseq
    %v738 = vshrl.u32 %v737, 7
    %v739 = vsub.s32 1, %v738
    %v740 = vrot.slane %v731, %v739
    %v741 = vlaneseq
    %v742 = vshrl.u32 %v741, 7
    %v743 = vsub.s32 0, %v742
    %v744 = vrot.slane %v732, %v743
    %v745 = vlaneseq
    %v746 = vshrl.u32 %v745, 7
    %v747 = vsub.s32 1, %v746
    %v748 = vrot.slane %v732, %v747
    %v755 = vunpack.c.l.s4 1966171168
    %v756 = vunpack.c.0.s8 %v755
    %v757 = vlaneseq
    %v758 = vshrl.u32 %v757, 7
    %v759 = vsub.s32 %v756, %v758
    %v760 = vrot.slane %v723, %v759
    %v761 = vcombine.high %v760, %v760
    %v762 = vlaneseq
    %v763 = vshrl.u32 %v762, 7
    %v764 = vsub.s32 0, %v763
    %v765 = vrot.slane %v760, %v764
    %v766 = vlaneseq
    %v767 = vshrl.u32 %v766, 7
    %v768 = vsub.s32 1, %v767
    %v769 = vrot.slane %v760, %v768
    %v770 = vlaneseq
    %v771 = vshrl.u32 %v770, 7
    %v772 = vsub.s32 0, %v771
    %v773 = vrot.slane %v761, %v772
    %v774 = vlaneseq
    %v775 = vshrl.u32 %v774, 7
    %v776 = vsub.s32 1, %v775
    %v777 = vrot.slane %v761, %v776
    %v782 = vsub.f32 %v658, %v765
    %v783 = vsub.f32 %v659, %v769
    %v784 = vsub.f32 %v660, %v765
    %v785 = vsub.f32 %v661, %v769
    %v786 = vsub.f32 %v662, %v765
    %v787 = vsub.f32 %v663, %v769
    %v788 = vsub.f32 %v664, %v765
    %v789 = vsub.f32 %v665, %v769
    %v790 = vsub.f32 %v666, %v765
    %v791 = vsub.f32 %v667, %v769
    %v792 = vsub.f32 %v668, %v765
    %v793 = vsub.f32 %v669, %v769
    %v794 = vsub.f32 %v670, %v765
    %v795 = vsub.f32 %v671, %v769
    %v796 = vsub.f32 %v672, %v765
    %v797 = vsub.f32 %v673, %v769
    %v798 = vsub.f32 %v674, %v765
    %v799 = vsub.f32 %v675, %v769
    %v800 = vsub.f32 %v676, %v765
    %v801 = vsub.f32 %v677, %v769
    %v802 = vsub.f32 %v678, %v765
    %v803 = vsub.f32 %v679, %v769
    %v804 = vsub.f32 %v680, %v765
    %v805 = vsub.f32 %v681, %v769
    %v806 = vsub.f32 %v682, %v765
    %v807 = vsub.f32 %v683, %v769
    %v808 = vsub.f32 %v684, %v765
    %v809 = vsub.f32 %v685, %v769
    %v810 = vsub.f32 %v686, %v765
    %v811 = vsub.f32 %v687, %v769
    %v812 = vsub.f32 %v688, %v765
    %v813 = vsub.f32 %v689, %v769
    %v814 = vsub.f32 %v690, %v773
    %v815 = vsub.f32 %v691, %v777
    %v816 = vsub.f32 %v692, %v773
    %v817 = vsub.f32 %v693, %v777
    %v818 = vsub.f32 %v694, %v773
    %v819 = vsub.f32 %v695, %v777
    %v820 = vsub.f32 %v696, %v773
    %v821 = vsub.f32 %v697, %v777
    %v822 = vsub.f32 %v698, %v773
    %v823 = vsub.f32 %v699, %v777
    %v824 = vsub.f32 %v700, %v773
    %v825 = vsub.f32 %v701, %v777
    %v826 = vsub.f32 %v702, %v773
    %v827 = vsub.f32 %v703, %v777
    %v828 = vsub.f32 %v704, %v773
    %v829 = vsub.f32 %v705, %v777
    %v830 = vsub.f32 %v706, %v773
    %v831 = vsub.f32 %v707, %v777
    %v832 = vsub.f32 %v708, %v773
    %v833 = vsub.f32 %v709, %v777
    %v834 = vsub.f32 %v710, %v773
    %v835 = vsub.f32 %v711, %v777
    %v836 = vsub.f32 %v712, %v773
    %v837 = vsub.f32 %v713, %v777
    %v838 = vsub.f32 %v714, %v773
    %v839 = vsub.f32 %v715, %v777
    %v840 = vsub.f32 %v716, %v773
    %v841 = vsub.f32 %v717, %v777
    %v842 = vsub.f32 %v718, %v773
    %v843 = vsub.f32 %v719, %v777
    %v844 = vsub.f32 %v720, %v773
    %v845 = vsub.f32 %v721, %v777
    %v846 = vmul.f32 %v782, %v736
    %v847 = vmul.f32 %v783, %v740
    %v848 = vmul.f32 %v784, %v736
    %v849 = vmul.f32 %v785, %v740
    %v850 = vmul.f32 %v786, %v736
    %v851 = vmul.f32 %v787, %v740
    %v852 = vmul.f32 %v788, %v736
    %v853 = vmul.f32 %v789, %v740
    %v854 = vmul.f32 %v790, %v736
    %v855 = vmul.f32 %v791, %v740
    %v856 = vmul.f32 %v792, %v736
    %v857 = vmul.f32 %v793, %v740
    %v858 = vmul.f32 %v794, %v736
    %v859 = vmul.f32 %v795, %v740
    %v860 = vmul.f32 %v796, %v736
    %v861 = vmul.f32 %v797, %v740
    %v862 = vmul.f32 %v798, %v736
    %v863 = vmul.f32 %v799, %v740
    %v864 = vmul.f32 %v800, %v736
    %v865 = vmul.f32 %v801, %v740
    %v866 = vmul.f32 %v802, %v736
    %v867 = vmul.f32 %v803, %v740
    %v868 = vmul.f32 %v804, %v736
    %v869 = vmul.f32 %v805, %v740
    %v870 = vmul.f32 %v806, %v736
    %v871 = vmul.f32 %v807, %v740
    %v872 = vmul.f32 %v808, %v736
    %v873 = vmul.f32 %v809, %v740
    %v874 = vmul.f32 %v810, %v736
    %v875 = vmul.f32 %v811, %v740
    %v876 = vmul.f32 %v812, %v736
    %v877 = vmul.f32 %v813, %v740
    %v878 = vmul.f32 %v814, %v744
    %v879 = vmul.f32 %v815, %v748
    %v880 = vmul.f32 %v816, %v744
    %v881 = vmul.f32 %v817, %v748
    %v882 = vmul.f32 %v818, %v744
    %v883 = vmul.f32 %v819, %v748
    %v884 = vmul.f32 %v820, %v744
    %v885 = vmul.f32 %v821, %v748
    %v886 = vmul.f32 %v822, %v744
    %v887 = vmul.f32 %v823, %v748
    %v888 = vmul.f32 %v824, %v744
    %v889 = vmul.f32 %v825, %v748
    %v890 = vmul.f32 %v826, %v744
    %v891 = vmul.f32 %v827, %v748
    %v892 = vmul.f32 %v828, %v744
    %v893 = vmul.f32 %v829, %v748
    %v894 = vmul.f32 %v830, %v744
    %v895 = vmul.f32 %v831, %v748
    %v896 = vmul.f32 %v832, %v744
    %v897 = vmul.f32 %v833, %v748
    %v898 = vmul.f32 %v834, %v744
    %v899 = vmul.f32 %v835, %v748
    %v900 = vmul.f32 %v836, %v744
    %v901 = vmul.f32 %v837, %v748
    %v902 = vmul.f32 %v838, %v744
    %v903 = vmul.f32 %v839, %v748
    %v904 = vmul.f32 %v840, %v744
    %v905 = vmul.f32 %v841, %v748
    %v906 = vmul.f32 %v842, %v744
    %v907 = vmul.f32 %v843, %v748
    %v908 = vmul.f32 %v844, %v744
    %v909 = vmul.f32 %v845, %v748
    %v910 = vpack.c.bf16 %v848, %v846
    %v911 = vpack.c.bf16 %v849, %v847
    %v912 = vpack.c.bf16 %v852, %v850
    %v913 = vpack.c.bf16 %v853, %v851
    %v914 = vpack.c.bf16 %v856, %v854
    %v915 = vpack.c.bf16 %v857, %v855
    %v916 = vpack.c.bf16 %v860, %v858
    %v917 = vpack.c.bf16 %v861, %v859
    %v918 = vpack.c.bf16 %v864, %v862
    %v919 = vpack.c.bf16 %v865, %v863
    %v920 = vpack.c.bf16 %v868, %v866
    %v921 = vpack.c.bf16 %v869, %v867
    %v922 = vpack.c.bf16 %v872, %v870
    %v923 = vpack.c.bf16 %v873, %v871
    %v924 = vpack.c.bf16 %v876, %v874
    %v925 = vpack.c.bf16 %v877, %v875
    %v926 = vpack.c.bf16 %v880, %v878
    %v927 = vpack.c.bf16 %v881, %v879
    %v928 = vpack.c.bf16 %v884, %v882
    %v929 = vpack.c.bf16 %v885, %v883
    %v930 = vpack.c.bf16 %v888, %v886
    %v931 = vpack.c.bf16 %v889, %v887
    %v932 = vpack.c.bf16 %v892, %v890
    %v933 = vpack.c.bf16 %v893, %v891
    %v934 = vpack.c.bf16 %v896, %v894
    %v935 = vpack.c.bf16 %v897, %v895
    %v936 = vpack.c.bf16 %v900, %v898
    %v937 = vpack.c.bf16 %v901, %v899
    %v938 = vpack.c.bf16 %v904, %v902
    %v939 = vpack.c.bf16 %v905, %v903
    %v940 = vpack.c.bf16 %v908, %v906
    %v941 = vpack.c.bf16 %v909, %v907
    %v944 = vunpack.c.l.b16 %v57
    %v945 = vunpack.c.h.b16 %v57
    %v946 = vunpack.c.l.b16 %v58
    %v947 = vunpack.c.h.b16 %v58
    %v948 = vpack.c.b16 %v946, %v944
    %v949 = vpack.c.b16 %v947, %v945
    %952 = vmatprep.subr.bf16.mxu0 %v911
    %953 = vmatpush1.bf16.msra.mxu0 %v910
    %954 = vmatprep.subr.bf16.mxu0 %v913
    %955 = vmatpush1.bf16.msra.mxu0 %v912
    %956 = vmatprep.subr.bf16.mxu0 %v915
    %957 = vmatpush1.bf16.msra.mxu0 %v914
    %958 = vmatprep.subr.bf16.mxu0 %v917
    %959 = vmatpush1.bf16.msra.mxu0 %v916
    %960 = vmatprep.subr.bf16.mxu0 %v919
    %961 = vmatpush1.bf16.msra.mxu0 %v918
    %962 = vmatprep.subr.bf16.mxu0 %v921
    %963 = vmatpush1.bf16.msra.mxu0 %v920
    %964 = vmatprep.subr.bf16.mxu0 %v923
    %965 = vmatpush1.bf16.msra.mxu0 %v922
    %966 = vmatprep.subr.bf16.mxu0 %v925
    %967 = vmatpush1.bf16.msra.mxu0 %v924
    %968 = vmatprep.subr.bf16.mxu0 %v927
    %969 = vmatpush1.bf16.msra.mxu0 %v926
    %970 = vmatprep.subr.bf16.mxu0 %v929
    %971 = vmatpush1.bf16.msra.mxu0 %v928
    %972 = vmatprep.subr.bf16.mxu0 %v931
    %973 = vmatpush1.bf16.msra.mxu0 %v930
    %974 = vmatprep.subr.bf16.mxu0 %v933
    %975 = vmatpush1.bf16.msra.mxu0 %v932
    %976 = vmatprep.subr.bf16.mxu0 %v935
    %977 = vmatpush1.bf16.msra.mxu0 %v934
    %978 = vmatprep.subr.bf16.mxu0 %v937
    %979 = vmatpush1.bf16.msra.mxu0 %v936
    %980 = vmatprep.subr.bf16.mxu0 %v939
    %981 = vmatpush1.bf16.msra.mxu0 %v938
    %982 = vmatprep.subr.bf16.mxu0 %v941
    %983 = vmatpush1.bf16.msra.mxu0 %v940
    %984 = vmatprep.mubr.bf16.mxu0 %v949
    %985 = vmatmul.mubr.bf16.gmra.mrb[0].mxu0 %v948
    %v986 = vpop.f32.mrb[0].mxu0
    %v987 = vadd.f32 0.0, %v986
    %v988 = vpop.f32.mrb[0].mxu0
    %v989 = vadd.f32 0.0, %v988
    %v990 = vpop.f32.mrb[0].mxu0
    %v991 = vadd.f32 0.0, %v990
    %v992 = vpop.f32.mrb[0].mxu0
    %v993 = vadd.f32 0.0, %v992
    %994 = vdwg.mxu0
    %v995 = vadd.f32 %v62, %v987
    %v996 = vadd.f32 %v63, %v989
    %v997 = vadd.f32 %v64, %v991
    %v998 = vadd.f32 %v65, %v993
    %999 = vst [vmem:[#allocation7] sm:$0xff] %v995
    %1000 = vst [vmem:[#allocation7 + $0x8] sm:$0xff] %v996
    %1001 = vst [vmem:[#allocation7 + $0x10] sm:$0xff] %v997
    %1002 = vst [vmem:[#allocation7 + $0x18] sm:$0xff] %v998
    // Predicated region
    $region34: #{tpu_custom_call.1} parent=1 // pred_check
      %p1003 = pneg %p49
    $region35: #{tpu_custom_call.1} parent=1 // pred_check_branch
      %1005 = sbr.rel (%p1003) target = $region37
    $region36: #{tpu_custom_call.1} parent=1 // pred_region
      %v1006 = vld [vmem:[#allocation7] sm:$0xff]
      %v1007 = vld [vmem:[#allocation7 + $0x8] sm:$0xff]
      %v1008 = vld [vmem:[#allocation7 + $0x10] sm:$0xff]
      %v1009 = vld [vmem:[#allocation7 + $0x18] sm:$0xff]
      %v1010 = vld [vmem:[%s4] sm:$0x3]
      %v1012 = vlaneseq
      %v1013 = vshrl.u32 %v1012, 7
      %v1014 = vsub.s32 0, %v1013
      %v1015 = vrot.slane %v1010, %v1014
      %v1016 = vlaneseq
      %v1017 = vshrl.u32 %v1016, 7
      %v1018 = vsub.s32 1, %v1017
      %v1019 = vrot.slane %v1010, %v1018
      %v1022 = vadd.f32 %v1006, %v1015
      %v1023 = vadd.f32 %v1007, %v1019
      %v1024 = vadd.f32 %v1008, %v1015
      %v1025 = vadd.f32 %v1009, %v1019
      %1026 = vst [vmem:[#allocation7] sm:$0xff] %v1022
      %1027 = vst [vmem:[#allocation7 + $0x8] sm:$0xff] %v1023
      %1028 = vst [vmem:[#allocation7 + $0x10] sm:$0xff] %v1024
      %1029 = vst [vmem:[#allocation7 + $0x18] sm:$0xff] %v1025
    $region37: #{tpu_custom_call.1} parent=1 // pred_fallthru
      _
    // Predicated region
    $region38: #{tpu_custom_call.1} parent=1 // pred_check
      _
    $region39: #{tpu_custom_call.1} parent=1 // pred_check_branch
      %1031 = sbr.rel (0) target = $region41
    $region40: #{tpu_custom_call.1} parent=1 // pred_region
      %s1033 = ssub.s32 512, 512
      %1034 = vsyncadd [#allocation4], %s1033
      %s1035 = sshll.u32 [#allocation7], 4
      %s1036 = int_to_ptr.vmem [resolvable:$true] %s1035
      %1041 = dma.vmem_to_hbm [thread:$0]  %s1036, 512, %s5, [#allocation4], 256, 256, 16
    $region41: #{tpu_custom_call.1} parent=1 // pred_fallthru
      _
    // Predicated region
    $region42: #{tpu_custom_call.1} parent=1 // pred_check
      _
    $region43: #{tpu_custom_call.1} parent=1 // pred_check_branch
      %1043 = sbr.rel (0) target = $region45
    $region44: #{tpu_custom_call.1} parent=1 // pred_region
      %1044 = dma.done [#allocation4], 512
    $region45: #{tpu_custom_call.1} parent=1 // pred_fallthru
      _
    %1045 = vsyncpa [#allocation3], 1
    %1046 = vsyncpa [#allocation6], 1
    %1047 = vsyncpa [#allocation4], 1

</llo_original>
